<compile_context>
chip_gen: v7x
topology: tpu7x:2x2x1
jax: 0.10.0
libtpu: 0.0.40
codegen_flags: <defaults>
</compile_context>

<pallas_src>
import functools

import jax
import jax.numpy as jnp
from jax.experimental import pallas as pl
from jax.experimental.pallas import tpu as pltpu


def _rmsnorm_kernel(x_ref, w_ref, o_ref, *, eps, inv_hidden):
    # x_ref: (TILE_ROWS, HIDDEN) in input dtype
    # w_ref: (1, HIDDEN) float32, already holds (1 + weight)
    # o_ref: (TILE_ROWS, HIDDEN) in input dtype
    xf = x_ref[...].astype(jnp.float32)
    ss = jnp.sum(xf * xf, axis=-1, keepdims=True)          # per-row sum of squares
    inv = jax.lax.rsqrt(ss * inv_hidden + eps)              # EUP rsqrt, VPU multiply
    # Re-read + re-cast for the second use so a full f32 copy of the tile does not
    # have to stay live across the reduction (matters for bf16/int8 tiles: avoids a
    # 2x-4x f32 VMEM temporary straining vst slots / the scoped VMEM limit).
    o_ref[...] = (x_ref[...].astype(jnp.float32) * inv * w_ref[...]).astype(o_ref.dtype)


def _sublane_pack(dtype) -> int:
    # f32 -> 8, bf16/f16 -> 16, int8/fp8 -> 32 sublanes per packed vreg.
    itemsize = jnp.dtype(dtype).itemsize
    return max(8, 32 // itemsize)


def _vmem_capacity_bytes() -> int:
    try:
        info = pltpu.get_tpu_info()
        cap = getattr(info, "vmem_capacity_bytes", None)
        if cap:
            return int(cap)
    except Exception:
        pass
    return 64 * 1024 * 1024  # conservative fallback: v7x per-TensorCore VMEM


def _choose_tile_rows(rows: int, hidden: int, dtype, per_buffer_bytes: int) -> int:
    """Largest dtype-aligned row tile within the per-buffer budget, with >=2 grid steps
    when the problem allows it (keeps both v7x TensorCores busy)."""
    pack = _sublane_pack(dtype)
    itemsize = jnp.dtype(dtype).itemsize
    row_bytes = max(1, hidden * itemsize)

    tr = per_buffer_bytes // row_bytes
    tr = max(pack, (tr // pack) * pack)           # >= one packed vreg of sublanes
    rows_pack = ((rows + pack - 1) // pack) * pack
    tr = min(tr, rows_pack)                       # don't exceed the (packed) problem

    # Keep at least 2 (up to 4) grid steps when rows permit: enables megacore split
    # on v7x and DMA/compute overlap; per-step overhead (~0.35 us) is negligible.
    min_steps = min(4, rows_pack // pack)
    if min_steps > 1:
        cap = -(-rows_pack // min_steps)          # cdiv
        cap = ((cap + pack - 1) // pack) * pack
        tr = min(tr, max(pack, cap))
    return tr


def gemma_rms_norm(x, weight, eps=1e-6, tile_rows=None):
    """x: (..., hidden); weight: (hidden,). Returns same shape/dtype as x."""
    orig_shape = x.shape
    hidden = orig_shape[-1]
    rows = 1
    for d in orig_shape[:-1]:
        rows *= d

    x2 = x.reshape(rows, hidden)
    # Precompute (1 + weight) once (O(hidden)); kept resident in VMEM via a
    # constant-index BlockSpec.
    w2 = (1.0 + weight.astype(jnp.float32)).reshape(1, hidden)

    itemsize = jnp.dtype(x.dtype).itemsize
    vmem_cap = _vmem_capacity_bytes()
    vmem_limit = min(vmem_cap // 2, 64 * 1024 * 1024)      # 32 MiB on v7x, 64 MiB on v5e/v6e
    # Narrow dtypes get half the per-buffer budget: their f32 compute temporaries are
    # 2x-4x the tile size, so this keeps total footprint well under the scoped limit.
    per_buffer = vmem_limit // (8 if itemsize >= 4 else 16)

    if tile_rows is None:
        tile_rows = _choose_tile_rows(rows, hidden, x.dtype, per_buffer)

    # Footprint guard (double-buffered in+out blocks + generous f32 temporaries + weight).
    block_bytes = tile_rows * hidden * itemsize
    block_bytes_f32 = tile_rows * hidden * 4
    need = 4 * block_bytes + 2 * block_bytes_f32 + 2 * hidden * 4 + (1 << 20)
    if need > vmem_limit:
        # TODO(synk): for very large `hidden`, split the feature dim over a second
        # ("arbitrary") grid axis with a two-pass sum-of-squares accumulator instead of
        # relying on one (pack, hidden) block fitting in VMEM.
        vmem_limit = min(need, vmem_cap)

    # Ragged rows are handled by the grid itself: the last block may extend past `rows`;
    # OOB rows read undefined data (harmless — reduction is per-row along hidden only)
    # and are masked off on the write.  No pad/slice HBM round trips.
    grid = (pl.cdiv(rows, tile_rows),)

    kernel = functools.partial(
        _rmsnorm_kernel, eps=float(eps), inv_hidden=1.0 / float(hidden)
    )

    out = pl.pallas_call(
        kernel,
        out_shape=jax.ShapeDtypeStruct((rows, hidden), x.dtype),
        grid_spec=pltpu.PrefetchScalarGridSpec(
            num_scalar_prefetch=0,
            grid=grid,
            in_specs=[
                pl.BlockSpec((tile_rows, hidden), lambda i: (i, 0)),
                pl.BlockSpec((1, hidden), lambda i: (0, 0)),  # constant index: loaded once
            ],
            out_specs=pl.BlockSpec((tile_rows, hidden), lambda i: (i, 0)),
        ),
        compiler_params=pltpu.CompilerParams(
            dimension_semantics=("parallel",),
            vmem_limit_bytes=int(vmem_limit),
        ),
    )(x2, w2)

    return out.reshape(orig_shape)


def _reference(x, weight, eps=1e-6):
    xf = x.astype(jnp.float32)
    normed = xf * jax.lax.rsqrt(jnp.mean(xf * xf, axis=-1, keepdims=True) + eps)
    out = normed * (1.0 + weight.astype(jnp.float32))
    return out.astype(x.dtype)


if __name__ == "__main__":
    key = jax.random.PRNGKey(0)
    kx, kw, kx2 = jax.random.split(key, 3)

    # Module-consistent small shapes: (batch, seq, hidden); hidden multiple of 128.
    batch, seq, hidden = 2, 8, 256
    x = jax.random.normal(kx, (batch, seq, hidden), dtype=jnp.float32)
    # Module __init__ uses zeros(dim); perturb so the (1 + weight) path is exercised.
    weight = 0.1 * jax.random.normal(kw, (hidden,), dtype=jnp.float32)

    y = jax.block_until_ready(gemma_rms_norm(x, weight, eps=1e-6))
    y_ref = _reference(x, weight, eps=1e-6)
    assert y.shape == x.shape and y.dtype == x.dtype
    assert jnp.allclose(y, y_ref, atol=1e-5, rtol=1e-5), "f32 mismatch vs reference"

    # Ragged row count (batch*seq not a multiple of the tile) exercises the masked
    # last block (no pad/slice copies).
    x_odd = jax.random.normal(kx2, (3, 5, hidden), dtype=jnp.float32)
    y_odd = jax.block_until_ready(gemma_rms_norm(x_odd, weight, eps=1e-6))
    y_odd_ref = _reference(x_odd, weight, eps=1e-6)
    assert y_odd.shape == x_odd.shape
    assert jnp.allclose(y_odd, y_odd_ref, atol=1e-5, rtol=1e-5), "ragged mismatch"

    # bf16 input path (sublane packing = 16, f32 compute inside the kernel).
    x_bf16 = x.astype(jnp.bfloat16)
    y_bf16 = jax.block_until_ready(gemma_rms_norm(x_bf16, weight, eps=1e-6))
    y_bf16_ref = _reference(x_bf16, weight, eps=1e-6)
    assert y_bf16.dtype == jnp.bfloat16
    assert jnp.allclose(y_bf16.astype(jnp.float32), y_bf16_ref.astype(jnp.float32),
                        atol=1e-2, rtol=1e-2), "bf16 mismatch vs reference"

    print("KERNEL_OK")
</pallas_src>

<mosaic_0001>
module attributes {stable_mosaic.version = 11 : i64} {
  func.func @_rmsnorm_kernel(%arg0: i32, %arg1: memref<8x256xf32, #tpu.memory_space<vmem>>, %arg2: memref<1x256xf32, #tpu.memory_space<vmem>>, %arg3: memref<8x256xf32, #tpu.memory_space<vmem>>) attributes {dimension_semantics = [#tpu.dimension_semantics<parallel>], iteration_bounds = array<i64: 2>, scalar_prefetch = 0 : i64, scratch_operands = 0 : i64, tpu.core_type = #tpu.core_type<tc>, window_params = [{transform_indices = @transform_0, window_bounds = array<i64: 8, 256>}, {pipeline_mode = #tpu.pipeline_mode<synchronous>, transform_indices = @transform_1, window_bounds = array<i64: 1, 256>}, {transform_indices = @transform_2, window_bounds = array<i64: 8, 256>}]} {
    %c0 = arith.constant 0 : index
    %c0_0 = arith.constant 0 : index
    %0 = vector.load %arg1[%c0, %c0_0] : memref<8x256xf32, #tpu.memory_space<vmem>>, vector<8x256xf32>
    %1 = arith.mulf %0, %0 : vector<8x256xf32>
    %cst = arith.constant dense<0.000000e+00> : vector<8xf32>
    %2 = vector.multi_reduction <add>, %1, %cst [1] : vector<8x256xf32> to vector<8xf32>
    %3 = vector.shape_cast %2 : vector<8xf32> to vector<8x1xf32>
    %cst_1 = arith.constant 3.906250e-03 : f32
    %4 = vector.broadcast %cst_1 : f32 to vector<8x1xf32>
    %5 = arith.mulf %3, %4 : vector<8x1xf32>
    %cst_2 = arith.constant 9.99999997E-7 : f32
    %6 = vector.broadcast %cst_2 : f32 to vector<8x1xf32>
    %7 = arith.addf %5, %6 : vector<8x1xf32>
    %8 = math.rsqrt %7 : vector<8x1xf32>
    %c0_3 = arith.constant 0 : index
    %c0_4 = arith.constant 0 : index
    %9 = vector.load %arg1[%c0_3, %c0_4] : memref<8x256xf32, #tpu.memory_space<vmem>>, vector<8x256xf32>
    %10 = vector.broadcast %8 : vector<8x1xf32> to vector<8x256xf32>
    %11 = arith.mulf %9, %10 : vector<8x256xf32>
    %c0_5 = arith.constant 0 : index
    %c0_6 = arith.constant 0 : index
    %12 = vector.load %arg2[%c0_5, %c0_6] : memref<1x256xf32, #tpu.memory_space<vmem>>, vector<1x256xf32>
    %13 = vector.broadcast %12 : vector<1x256xf32> to vector<8x256xf32>
    %14 = arith.mulf %11, %13 : vector<8x256xf32>
    %c0_7 = arith.constant 0 : index
    %c0_8 = arith.constant 0 : index
    %15 = vector.load %arg3[%c0_7, %c0_8] : memref<8x256xf32, #tpu.memory_space<vmem>>, vector<8x256xf32>
    tpu.vector_store %arg3[%c0_7, %c0_8], %14 {strides = array<i32>} : memref<8x256xf32, #tpu.memory_space<vmem>>, vector<8x256xf32>,
    return
  }
  func.func @transform_0(%arg0: i32) -> (i32, i32) {
    %c0_i32 = arith.constant 0 : i32
    %c0_i32_0 = arith.constant 0 : i32
    return %arg0, %c0_i32 : i32, i32
  }
  func.func @transform_1(%arg0: i32) -> (i32, i32) {
    %c0_i32 = arith.constant 0 : i32
    %c0_i32_0 = arith.constant 0 : i32
    %c0_i32_1 = arith.constant 0 : i32
    return %c0_i32, %c0_i32_0 : i32, i32
  }
  func.func @transform_2(%arg0: i32) -> (i32, i32) {
    %c0_i32 = arith.constant 0 : i32
    %c0_i32_0 = arith.constant 0 : i32
    return %arg0, %c0_i32 : i32, i32
  }
}

</mosaic_0001>

<llo_original>
// kernel: tpu_custom_call.1
$region0: #{tpu_custom_call.1}
  #allocation0 [shape = 'u32[]', space=smem, size = 0x4, offset = 0x4, fixed_abs, tag = 'smem constant byte address 0x4 - core index']
  #allocation1 [shape = 'u32[144,128]{1,0:T(1,128)}', space=vmem, size = 0x12000, scoped, tag = 'internal scratch']
  %s0 = inlined_call_operand.hbm [shape: f32[16,256], index: 0, kind: input, shape index: {}]
  %s1 = inlined_call_operand.vmem [shape: f32[1,256], index: 1, kind: input, shape index: {}]
  %s2 = inlined_call_operand.hbm [shape: f32[16,256], index: 2, kind: output, shape index: {}]
  %s3 = sld [smem:[#allocation0]]
  $region45: #{tpu_custom_call.1} parent=0
    _
  %s5 = ssub.s32 1, %s3
  %s6 = scalar_select 0, %s5, %s3
  $region1: #{tpu_custom_call.1} parent=0
    #allocation2 [shape = 'u8[16384]{0}', space=vmem, size = 0x4000, scoped, tag = 'input window, operand 0']
    #allocation3 [shape = 's32[2]{0}', space=sflag, size = 0x8, scoped, tag = 'scoped memory for tpu_custom_call.1']
    #allocation4 [shape = 's32[2]{0}', space=sflag, size = 0x8, scoped, tag = 'scoped memory for tpu_custom_call.1']
    #allocation5 [shape = 'u8[16384]{0}', space=vmem, size = 0x4000, scoped, tag = 'output window, operand 0']
    %7 = vsyncpa [#allocation3], 0
    %s8 = scalar_lea.sflag [#allocation3], 1
    %9 = vsyncpa %s8, 0
    %10 = vsyncpa [#allocation4], 0
    %s11 = scalar_lea.sflag [#allocation4], 1
    %12 = vsyncpa %s11, 0
    loop: start=0, step=1, limit=4
    $region2: #{tpu_custom_call.1} parent=1 // loop_pre_header
      _
    $region3: #{tpu_custom_call.1} parent=1 // loop_header
      %s14 = sphi 0, %s18
      %p15 = scmp.ge.s32.totalorder %s14, 4
      %s24 = sphi 0, %s26
      %s27 = sphi 0, %s24
      %s28 = sphi 0, %s27
      %s44 = sphi 0, %s28
      %s48 = sphi 0, %s48
      %s50 = sphi 0, %s48
      %s51 = sphi 0, %s50
      %s65 = sphi 0, %s51
      %s71 = sphi 0, %s73
      %s74 = sphi 0, %s71
      %s75 = sphi 0, %s74
      %s91 = sphi 0, %s75
    $region4: #{tpu_custom_call.1} parent=1 // loop_header_branch
      %17 = sbr.rel (%p15) target = $region8
    $region5: #{tpu_custom_call.1} parent=1 // loop_body
      %s19 = ssub.s32 %s14, 1
      %s20 = ssub.s32 %s14, 2
      %s21 = sadd.s32 %s14, 1
      %s22 = ssub.s32 %s14, %s21
      %p23 = scmp.eq.s32.totalorder %s22, 0
      %s25 = sadd.s32 %s24, 1
      %s26 = scalar_select %p23, %s24, %s25
      %p29 = pneg %p23
      %p30 = scmp.eq.s32.totalorder %s14, 1
      %p31 = por %p29, %p30
      %p32 = scmp.ne.s32.totalorder %s24, %s27
      %p33 = scmp.eq.s32.totalorder %s14, 0
      %p34 = por %p32, %p33
      %p35 = scmp.ne.s32.totalorder %s24, %s27
      %p36 = scmp.eq.s32.totalorder %s19, 1
      %p37 = por %p35, %p36
      %p38 = scmp.ne.s32.totalorder %s27, %s28
      %p39 = scmp.eq.s32.totalorder %s19, 0
      %p40 = por %p38, %p39
      %p41 = scmp.ne.s32.totalorder %s27, %s28
      %p42 = scmp.eq.s32.totalorder %s20, 1
      %p43 = por %p41, %p42
      %p45 = scmp.ne.s32.totalorder %s28, %s44
      %p46 = scmp.eq.s32.totalorder %s20, 0
      %p47 = por %p45, %p46
      %s49 = sadd.s32 %s48, 1
      %p52 = scmp.eq.s32.totalorder %s14, 1
      %p53 = scmp.ne.s32.totalorder %s48, %s50
      %p54 = scmp.eq.s32.totalorder %s14, 0
      %p55 = por %p53, %p54
      %p56 = scmp.ne.s32.totalorder %s48, %s50
      %p57 = scmp.eq.s32.totalorder %s19, 1
      %p58 = por %p56, %p57
      %p59 = scmp.ne.s32.totalorder %s50, %s51
      %p60 = scmp.eq.s32.totalorder %s19, 0
      %p61 = por %p59, %p60
      %p62 = scmp.ne.s32.totalorder %s50, %s51
      %p63 = scmp.eq.s32.totalorder %s20, 1
      %p64 = por %p62, %p63
      %p66 = scmp.ne.s32.totalorder %s51, %s65
      %p67 = scmp.eq.s32.totalorder %s20, 0
      %p68 = por %p66, %p67
      %s69 = ssub.s32 %s14, %s21
      %p70 = scmp.eq.s32.totalorder %s69, 0
      %s72 = sadd.s32 %s71, 1
      %s73 = scalar_select %p70, %s71, %s72
      %p76 = pneg %p70
      %p77 = scmp.eq.s32.totalorder %s14, 1
      %p78 = por %p76, %p77
      %p79 = scmp.ne.s32.totalorder %s71, %s74
      %p80 = scmp.eq.s32.totalorder %s14, 0
      %p81 = por %p79, %p80
      %p82 = scmp.ne.s32.totalorder %s71, %s74
      %p83 = scmp.eq.s32.totalorder %s19, 1
      %p84 = por %p82, %p83
      %p85 = scmp.ne.s32.totalorder %s74, %s75
      %p86 = scmp.eq.s32.totalorder %s19, 0
      %p87 = por %p85, %p86
      %p88 = scmp.ne.s32.totalorder %s74, %s75
      %p89 = scmp.eq.s32.totalorder %s20, 1
      %p90 = por %p88, %p89
      %p92 = scmp.ne.s32.totalorder %s75, %s91
      %p93 = scmp.eq.s32.totalorder %s20, 0
      %p94 = por %p92, %p93
      %p95 = scmp.le.s32.totalorder 1, %s14
      %p96 = scmp.lt.s32.totalorder %s14, 3
      %p97 = pnand %p95, %p96
      %p98 = pneg %p97
      // Predicated region
      $region9: #{tpu_custom_call.1} parent=5 // pred_check
        _
      $region10: #{tpu_custom_call.1} parent=5 // pred_check_branch
        %100 = sbr.rel (%p97) target = $region12
      $region11: #{tpu_custom_call.1} parent=5 // pred_region
        %s101 = ssub.s32 %s14, 1
        // Predicated region
        $region13: #{tpu_custom_call.1} parent=11 // pred_check
          %p102 = pneg %p61
        $region14: #{tpu_custom_call.1} parent=11 // pred_check_branch
          %104 = sbr.rel (%p102) target = $region16
        $region15: #{tpu_custom_call.1} parent=11 // pred_region
          _
        $region16: #{tpu_custom_call.1} parent=11 // pred_fallthru
          _
      $region12: #{tpu_custom_call.1} parent=5 // pred_fallthru
        _
      %p105 = scmp.lt.s32.totalorder %s14, 2
      // Predicated region
      $region17: #{tpu_custom_call.1} parent=5 // pred_check
        %p106 = pneg %p105
      $region18: #{tpu_custom_call.1} parent=5 // pred_check_branch
        %108 = sbr.rel (%p106) target = $region20
      $region19: #{tpu_custom_call.1} parent=5 // pred_region
        // Predicated region
        $region21: #{tpu_custom_call.1} parent=19 // pred_check
          %p109 = pneg %p34
        $region22: #{tpu_custom_call.1} parent=19 // pred_check_branch
          %111 = sbr.rel (%p109) target = $region24
        $region23: #{tpu_custom_call.1} parent=19 // pred_region
          %s112 = sand.u32 %s24, 1
          %s113 = scalar_lea.sflag [#allocation3], %s112
          %s114 = sand.u32 %s24, 1
          %s115 = smul.addr %s114, 16
          %s116 = scalar_lea.vmem [#allocation2], %s115
          %s118 = ssub.s32 256, 256
          %119 = vsyncadd %s113, %s118
          %s120 = smul.addr %s14, 2
          %s121 = smul.addr %s120, 128
          %s122 = scalar_lea.hbm %s0, %s121
          %s124 = sshll.u32 %s116, 4
          %s125 = int_to_ptr.vmem [resolvable:$true] %s124
          %127 = dma.hbm_to_vmem [thread:$0]  %s122, 256, %s125, %s113
        $region24: #{tpu_custom_call.1} parent=19 // pred_fallthru
          _
      $region20: #{tpu_custom_call.1} parent=5 // pred_fallthru
        _
      %p128 = scmp.le.s32.totalorder 1, %s14
      %p129 = scmp.lt.s32.totalorder %s14, 3
      %p130 = pnand %p128, %p129
      %p131 = pneg %p130
      // Predicated region
      $region25: #{tpu_custom_call.1} parent=5 // pred_check
        _
      $region26: #{tpu_custom_call.1} parent=5 // pred_check_branch
        %133 = sbr.rel (%p130) target = $region28
      $region27: #{tpu_custom_call.1} parent=5 // pred_region
        %s134 = ssub.s32 %s14, 1
        %s135 = sand.u32 %s27, 1
        %s136 = scalar_lea.sflag [#allocation3], %s135
        %s137 = sand.u32 %s27, 1
        %s138 = smul.addr %s137, 16
        %s139 = scalar_lea.vmem [#allocation2], %s138
        // Predicated region
        $region29: #{tpu_custom_call.1} parent=27 // pred_check
          %p140 = pneg %p40
        $region30: #{tpu_custom_call.1} parent=27 // pred_check_branch
          %142 = sbr.rel (%p140) target = $region32
        $region31: #{tpu_custom_call.1} parent=27 // pred_region
          %143 = dma.done %s136, 256
        $region32: #{tpu_custom_call.1} parent=27 // pred_fallthru
          _
        %s144 = sand.u32 %s27, 1
        %s145 = scalar_lea.sflag [#allocation3], %s144
        %s146 = sand.u32 %s27, 1
        %s147 = smul.addr %s146, 16
        %s148 = scalar_lea.vmem [#allocation2], %s147
        %p149 = pneg %p40
        %p150 = pneg %p37
        %p151 = pneg %p61
        %p152 = pneg %p58
        %p153 = pneg %p87
        %p154 = pneg %p84
        %s155 = sand.u32 %s74, 1
        %s156 = scalar_lea.sflag [#allocation4], %s155
        %s157 = sand.u32 %s74, 1
        %s158 = smul.addr %s157, 16
        %s159 = scalar_lea.vmem [#allocation5], %s158
        %v160 = vld [vmem:[%s139] sm:$0xff]
        %v161 = vld [vmem:[%s139 + $0x8] sm:$0xff]
        %v162 = vmul.f32 %v160, %v160
        %v163 = vmul.f32 %v161, %v161
        %v164 = vadd.f32 %v162, %v163
        %165 = vadd.xlane.f32.xlu0 %v164
        %v166 = vpop.xlane.xlu0 %165
        %v167 = vmul.f32 %v166, 0.00390625
        %v168 = vadd.f32 %v167, 1e-06
        %v169 = vrsqrt.pop %v168
        %v170 = vmul.f32 %v160, %v169
        %v171 = vmul.f32 %v161, %v169
        %v172 = vld [vmem:[%s1] sm:$0x3]
        %v174 = vlaneseq
        %v175 = vshrl.u32 %v174, 7
        %v176 = vsub.s32 0, %v175
        %v177 = vrot.slane %v172, %v176
        %v178 = vlaneseq
        %v179 = vshrl.u32 %v178, 7
        %v180 = vsub.s32 1, %v179
        %v181 = vrot.slane %v172, %v180
        %v184 = vmul.f32 %v170, %v177
        %v185 = vmul.f32 %v171, %v181
        %186 = vst [vmem:[%s159] sm:$0xff] %v184
        %187 = vst [vmem:[%s159 + $0x8] sm:$0xff] %v185
        %s188 = sand.u32 %s74, 1
        %s189 = scalar_lea.sflag [#allocation4], %s188
        %s190 = sand.u32 %s74, 1
        %s191 = smul.addr %s190, 16
        %s192 = scalar_lea.vmem [#allocation5], %s191
        // Predicated region
        $region33: #{tpu_custom_call.1} parent=27 // pred_check
          %p193 = pneg %p84
        $region34: #{tpu_custom_call.1} parent=27 // pred_check_branch
          %195 = sbr.rel (%p193) target = $region36
        $region35: #{tpu_custom_call.1} parent=27 // pred_region
          %s197 = ssub.s32 256, 256
          %198 = vsyncadd %s189, %s197
          %s199 = smul.addr %s19, 2
          %s200 = smul.addr %s199, 128
          %s201 = scalar_lea.hbm %s2, %s200
          %s203 = sshll.u32 %s192, 4
          %s204 = int_to_ptr.vmem [resolvable:$true] %s203
          %206 = dma.vmem_to_hbm [thread:$0]  %s204, 256, %s201, %s189
        $region36: #{tpu_custom_call.1} parent=27 // pred_fallthru
          _
      $region28: #{tpu_custom_call.1} parent=5 // pred_fallthru
        _
      %p207 = scmp.le.s32.totalorder 2, %s14
      // Predicated region
      $region37: #{tpu_custom_call.1} parent=5 // pred_check
        %p208 = pneg %p207
      $region38: #{tpu_custom_call.1} parent=5 // pred_check_branch
        %210 = sbr.rel (%p208) target = $region40
      $region39: #{tpu_custom_call.1} parent=5 // pred_region
        %s211 = ssub.s32 %s14, 2
        // Predicated region
        $region41: #{tpu_custom_call.1} parent=39 // pred_check
          %p212 = pneg %p90
        $region42: #{tpu_custom_call.1} parent=39 // pred_check_branch
          %214 = sbr.rel (%p212) target = $region44
        $region43: #{tpu_custom_call.1} parent=39 // pred_region
          %s215 = sand.u32 %s75, 1
          %s216 = scalar_lea.sflag [#allocation4], %s215
          %s217 = sand.u32 %s75, 1
          %s218 = smul.addr %s217, 16
          %s219 = scalar_lea.vmem [#allocation5], %s218
          %220 = dma.done %s216, 256
        $region44: #{tpu_custom_call.1} parent=39 // pred_fallthru
          _
      $region40: #{tpu_custom_call.1} parent=5 // pred_fallthru
        _
    $region6: #{tpu_custom_call.1} parent=1 // loop_footer
      %s18 = sadd.s32 1, %s14
    $region7: #{tpu_custom_call.1} parent=1 // loop_footer_branch
      %13 = sbr.rel target = $region3
    $region8: #{tpu_custom_call.1} parent=1 // loop_exit
      _
    %221 = vsyncpa [#allocation3], 1
    %s222 = scalar_lea.sflag [#allocation3], 1
    %223 = vsyncpa %s222, 1
    %224 = vsyncpa [#allocation4], 1
    %s225 = scalar_lea.sflag [#allocation4], 1
    %226 = vsyncpa %s225, 1

</llo_original>
